<compile_context>
chip_gen: v7x
topology: tpu7x:2x2x1
jax: 0.10.0
libtpu: 0.0.40
codegen_flags: <defaults>
</compile_context>

<pallas_src>
import jax
import jax.numpy as jnp
from jax import lax
from jax.experimental import pallas as pl
from jax.experimental.pallas import tpu as pltpu

LANE = 128      # TPU lane width (last dim)
SUBLANE = 8     # TPU sublane width (second-to-last dim)


def _round_up(x, m):
    return ((x + m - 1) // m) * m


def _cdiv(a, b):
    return -(-a // b)


def _pad2d(x, rows, cols):
    return jnp.pad(x, ((0, rows - x.shape[0]), (0, cols - x.shape[1])))


# ----------------------------------------------------------------------------
# Kernel: one batch tile of the whole MLP (3 matmuls + biases + ReLUs).
# ----------------------------------------------------------------------------
def critic_kernel(x_ref, w1_ref, b1_ref, w2_ref, b2_ref, w3_ref, b3_ref, out_ref):
    # fc1 + ReLU: (TB, K) @ (K, H1p) -> f32 (TB, H1p).  K is unpadded (S+A);
    # the MXU pads the contraction internally.
    h1 = jnp.dot(x_ref[...], w1_ref[...],
                 preferred_element_type=jnp.float32) + b1_ref[...]
    h1 = jnp.maximum(h1, 0.0)

    # fc2 + ReLU: (TB, H1p) @ (H1p, H2p) -> f32 (TB, H2p).
    h2 = jnp.dot(h1.astype(w2_ref.dtype), w2_ref[...],
                 preferred_element_type=jnp.float32) + b2_ref[...]
    h2 = jnp.maximum(h2, 0.0)

    # fc3, emitted transposed so the output block is a lane-dense (1, TB) row:
    #   out[0, b] = sum_h w3[0, h] * h2[b, h]      (rhs-transposed contraction)
    out = lax.dot_general(
        w3_ref[...], h2.astype(w3_ref.dtype),
        dimension_numbers=(((1,), (1,)), ((), ())),
        preferred_element_type=jnp.float32)
    out_ref[...] = (out + b3_ref[...]).astype(out_ref.dtype)


# ----------------------------------------------------------------------------
# One-time parameter preparation (layout + padding + dtype), NOT the hot path.
# ----------------------------------------------------------------------------
def prepare_params(params, compute_dtype=jnp.bfloat16):
    """PyTorch Linear stores W as (out, in).  Store transposed, zero-padded,
    lane-dense weights once.  K (= state_dim+action_dim) stays unpadded."""
    w1, b1, w2, b2, w3, b3 = (params[k] for k in ("w1", "b1", "w2", "b2", "w3", "b3"))
    H1, K = w1.shape
    H2 = w2.shape[0]
    H1p = _round_up(H1, LANE)
    H2p = _round_up(H2, LANE)

    return {
        "w1": _pad2d(w1.T, K, H1p).astype(compute_dtype),        # (K, H1p)
        "b1": _pad2d(b1.reshape(1, H1), 1, H1p).astype(jnp.float32),
        "w2": _pad2d(w2.T, H1p, H2p).astype(compute_dtype),      # (H1p, H2p)
        "b2": _pad2d(b2.reshape(1, H2), 1, H2p).astype(jnp.float32),
        "w3": _pad2d(w3, 1, H2p).astype(compute_dtype),          # (1, H2p) row
        "b3": b3.astype(jnp.float32).reshape(1, 1),              # folded in kernel
        "compute_dtype": compute_dtype,
    }


# ----------------------------------------------------------------------------
# Forward wrapper.
# ----------------------------------------------------------------------------
def critic_forward(state, action, prep, *, max_batch_tile=2048):
    """state: (B, S), action: (B, A). Returns (B, 1) float32."""
    w1p, b1p, w2p, b2p, w3p, b3p = (prep[k] for k in
                                    ("w1", "b1", "w2", "b2", "w3", "b3"))
    cdt = prep["compute_dtype"]

    B, S = state.shape
    A = action.shape[1]
    K, H1p = w1p.shape
    H2p = w2p.shape[1]
    assert K == S + A

    # Batch tiling: lane-dense (multiple of 128) tiles (also a multiple of 16
    # for bf16 sublane packing).  Use >= 2 grid steps whenever B allows it so
    # the "parallel" batch axis can be split across v7x's two TensorCores.
    B_min = _round_up(B, LANE)
    num_tiles = max(1, _cdiv(B_min, max_batch_tile))
    if num_tiles == 1 and B_min > LANE:
        num_tiles = 2
    TB = _round_up(_cdiv(B_min, num_tiles), LANE)
    B_pad = num_tiles * TB

    # Cheap layout plumbing only: concat + batch pad + cast.  No lane-padded
    # activation slab is materialized in HBM.
    x = jnp.concatenate([state, action], axis=1)
    x = jnp.pad(x, ((0, B_pad - B), (0, 0))).astype(cdt)

    itemsize = jnp.dtype(cdt).itemsize
    flops = 2 * B * (K * H1p + H1p * H2p + H2p)
    bytes_accessed = (B_pad * K * itemsize                                   # x
                      + (w1p.size + w2p.size + w3p.size) * itemsize          # weights
                      + (b1p.size + b2p.size + b3p.size) * 4                 # biases
                      + B_pad * 4)                                           # output row

    raw = pl.pallas_call(
        critic_kernel,
        out_shape=jax.ShapeDtypeStruct((1, B_pad), jnp.float32),
        grid=(num_tiles,),
        in_specs=[
            pl.BlockSpec((TB, K), lambda i: (i, 0)),     # activations: batch-tiled
            pl.BlockSpec((K, H1p), lambda i: (0, 0)),    # weights/biases: resident
            pl.BlockSpec((1, H1p), lambda i: (0, 0)),
            pl.BlockSpec((H1p, H2p), lambda i: (0, 0)),
            pl.BlockSpec((1, H2p), lambda i: (0, 0)),
            pl.BlockSpec((1, H2p), lambda i: (0, 0)),
            pl.BlockSpec((1, 1), lambda i: (0, 0)),
        ],
        out_specs=pl.BlockSpec((1, TB), lambda i: (0, i)),
        compiler_params=pltpu.CompilerParams(
            dimension_semantics=("parallel",),
            vmem_limit_bytes=32 * 1024 * 1024),
        cost_estimate=pl.CostEstimate(
            flops=flops, transcendentals=0, bytes_accessed=bytes_accessed),
    )(x, w1p, b1p, w2p, b2p, w3p, b3p)

    # Row 0 of the lane-dense (1, B_pad) slab holds fc3(+b3); slice valid batch.
    return raw[0, :B].reshape(B, 1)


# ----------------------------------------------------------------------------
# Reference / init helpers.
# ----------------------------------------------------------------------------
def init_params(key, state_dim, action_dim, hidden_dims):
    """Deterministic synthetic init matching nn.Linear parameter shapes."""
    in_dim = state_dim + action_dim
    h1, h2 = hidden_dims
    ks = jax.random.split(key, 6)

    def unif(k, shape, fan_in):
        bound = 1.0 / jnp.sqrt(fan_in)
        return jax.random.uniform(k, shape, jnp.float32, -bound, bound)

    return {
        "w1": unif(ks[0], (h1, in_dim), in_dim),
        "b1": unif(ks[1], (h1,), in_dim),
        "w2": unif(ks[2], (h2, h1), h1),
        "b2": unif(ks[3], (h2,), h1),
        "w3": unif(ks[4], (1, h2), h2),
        "b3": unif(ks[5], (1,), h2),
    }


def critic_reference(state, action, params):
    x = jnp.concatenate([state, action], axis=1)
    x = jnp.maximum(x @ params["w1"].T + params["b1"], 0.0)
    x = jnp.maximum(x @ params["w2"].T + params["b2"], 0.0)
    return x @ params["w3"].T + params["b3"]


if __name__ == "__main__":
    state_dim, action_dim = 12, 4
    hidden_dims = (32, 32)
    batch = 8

    key = jax.random.PRNGKey(0)
    k_s, k_a, k_p = jax.random.split(key, 3)
    state = jax.random.normal(k_s, (batch, state_dim), jnp.float32)
    action = jax.random.normal(k_a, (batch, action_dim), jnp.float32)
    params = init_params(k_p, state_dim, action_dim, hidden_dims)

    ref = critic_reference(state, action, params)

    # f32 matmul operands: tight tolerance vs. the f32 reference.
    prep_f32 = prepare_params(params, compute_dtype=jnp.float32)
    out_f32 = jax.block_until_ready(critic_forward(state, action, prep_f32))
    assert out_f32.shape == (batch, 1), out_f32.shape
    assert jnp.allclose(out_f32, ref, atol=1e-4, rtol=1e-4), \
        jnp.max(jnp.abs(out_f32 - ref))

    # bf16 matmul operands (default, MXU-native): f32 accumulation/bias/ReLU.
    prep_bf16 = prepare_params(params)
    out_bf16 = jax.block_until_ready(critic_forward(state, action, prep_bf16))
    assert out_bf16.shape == (batch, 1), out_bf16.shape
    assert jnp.allclose(out_bf16, ref, atol=5e-2, rtol=5e-2), \
        jnp.max(jnp.abs(out_bf16 - ref))

    print("KERNEL_OK")
</pallas_src>

<mosaic_0001>
module attributes {stable_mosaic.version = 11 : i64} {
  func.func @critic_kernel(%arg0: i32, %arg1: memref<128x16xf32, #tpu.memory_space<vmem>>, %arg2: memref<16x128xf32, #tpu.memory_space<vmem>>, %arg3: memref<1x128xf32, #tpu.memory_space<vmem>>, %arg4: memref<128x128xf32, #tpu.memory_space<vmem>>, %arg5: memref<1x128xf32, #tpu.memory_space<vmem>>, %arg6: memref<1x128xf32, #tpu.memory_space<vmem>>, %arg7: memref<1x1xf32, #tpu.memory_space<vmem>>, %arg8: memref<1x128xf32, #tpu.memory_space<vmem>>) attributes {dimension_semantics = [#tpu.dimension_semantics<parallel>], iteration_bounds = array<i64: 1>, scalar_prefetch = 0 : i64, scratch_operands = 0 : i64, tpu.core_type = #tpu.core_type<tc>, window_params = [{transform_indices = @transform_0, window_bounds = array<i64: 128, 16>}, {pipeline_mode = #tpu.pipeline_mode<synchronous>, transform_indices = @transform_1, window_bounds = array<i64: 16, 128>}, {pipeline_mode = #tpu.pipeline_mode<synchronous>, transform_indices = @transform_2, window_bounds = array<i64: 1, 128>}, {pipeline_mode = #tpu.pipeline_mode<synchronous>, transform_indices = @transform_3, window_bounds = array<i64: 128, 128>}, {pipeline_mode = #tpu.pipeline_mode<synchronous>, transform_indices = @transform_4, window_bounds = array<i64: 1, 128>}, {pipeline_mode = #tpu.pipeline_mode<synchronous>, transform_indices = @transform_5, window_bounds = array<i64: 1, 128>}, {pipeline_mode = #tpu.pipeline_mode<synchronous>, transform_indices = @transform_6, window_bounds = array<i64: 1, 1>}, {transform_indices = @transform_7, window_bounds = array<i64: 1, 128>}]} {
    %c0 = arith.constant 0 : index
    %c0_0 = arith.constant 0 : index
    %0 = vector.load %arg1[%c0, %c0_0] : memref<128x16xf32, #tpu.memory_space<vmem>>, vector<128x16xf32>
    %c0_1 = arith.constant 0 : index
    %c0_2 = arith.constant 0 : index
    %1 = vector.load %arg2[%c0_1, %c0_2] : memref<16x128xf32, #tpu.memory_space<vmem>>, vector<16x128xf32>
    %cst = arith.constant dense<0.000000e+00> : vector<128x128xf32>
    %2 = tpu.matmul %0, %1, %cst {dimension_numbers = #tpu.dot_dimension_numbers<[1], [0], [0], [1], [0, 0, 1, 1], [], []>} : vector<128x16xf32>, vector<16x128xf32>, vector<128x128xf32> -> vector<128x128xf32>
    %c0_3 = arith.constant 0 : index
    %c0_4 = arith.constant 0 : index
    %3 = vector.load %arg3[%c0_3, %c0_4] : memref<1x128xf32, #tpu.memory_space<vmem>>, vector<1x128xf32>
    %4 = vector.broadcast %3 : vector<1x128xf32> to vector<128x128xf32>
    %5 = arith.addf %2, %4 : vector<128x128xf32>
    %cst_5 = arith.constant 0.000000e+00 : f32
    %6 = vector.broadcast %cst_5 : f32 to vector<128x128xf32>
    %7 = arith.maximumf %5, %6 : vector<128x128xf32>
    %c0_6 = arith.constant 0 : index
    %c0_7 = arith.constant 0 : index
    %8 = vector.load %arg4[%c0_6, %c0_7] : memref<128x128xf32, #tpu.memory_space<vmem>>, vector<128x128xf32>
    %cst_8 = arith.constant dense<0.000000e+00> : vector<128x128xf32>
    %9 = tpu.matmul %7, %8, %cst_8 {dimension_numbers = #tpu.dot_dimension_numbers<[1], [0], [0], [1], [0, 0, 1, 1], [], []>} : vector<128x128xf32>, vector<128x128xf32>, vector<128x128xf32> -> vector<128x128xf32>
    %c0_9 = arith.constant 0 : index
    %c0_10 = arith.constant 0 : index
    %10 = vector.load %arg5[%c0_9, %c0_10] : memref<1x128xf32, #tpu.memory_space<vmem>>, vector<1x128xf32>
    %11 = vector.broadcast %10 : vector<1x128xf32> to vector<128x128xf32>
    %12 = arith.addf %9, %11 : vector<128x128xf32>
    %cst_11 = arith.constant 0.000000e+00 : f32
    %13 = vector.broadcast %cst_11 : f32 to vector<128x128xf32>
    %14 = arith.maximumf %12, %13 : vector<128x128xf32>
    %c0_12 = arith.constant 0 : index
    %c0_13 = arith.constant 0 : index
    %15 = vector.load %arg6[%c0_12, %c0_13] : memref<1x128xf32, #tpu.memory_space<vmem>>, vector<1x128xf32>
    %cst_14 = arith.constant dense<0.000000e+00> : vector<1x128xf32>
    %16 = tpu.matmul %15, %14, %cst_14 {dimension_numbers = #tpu.dot_dimension_numbers<[1], [1], [0], [0], [0, 0, 1, 0], [], []>} : vector<1x128xf32>, vector<128x128xf32>, vector<1x128xf32> -> vector<1x128xf32>
    %c0_15 = arith.constant 0 : index
    %c0_16 = arith.constant 0 : index
    %17 = vector.load %arg7[%c0_15, %c0_16] : memref<1x1xf32, #tpu.memory_space<vmem>>, vector<1x1xf32>
    %18 = vector.broadcast %17 : vector<1x1xf32> to vector<1x128xf32>
    %19 = arith.addf %16, %18 : vector<1x128xf32>
    %c0_17 = arith.constant 0 : index
    %c0_18 = arith.constant 0 : index
    %20 = vector.load %arg8[%c0_17, %c0_18] : memref<1x128xf32, #tpu.memory_space<vmem>>, vector<1x128xf32>
    tpu.vector_store %arg8[%c0_17, %c0_18], %19 {strides = array<i32>} : memref<1x128xf32, #tpu.memory_space<vmem>>, vector<1x128xf32>,
    return
  }
  func.func @transform_0(%arg0: i32) -> (i32, i32) {
    %c0_i32 = arith.constant 0 : i32
    %c0_i32_0 = arith.constant 0 : i32
    return %arg0, %c0_i32 : i32, i32
  }
  func.func @transform_1(%arg0: i32) -> (i32, i32) {
    %c0_i32 = arith.constant 0 : i32
    %c0_i32_0 = arith.constant 0 : i32
    %c0_i32_1 = arith.constant 0 : i32
    return %c0_i32, %c0_i32_0 : i32, i32
  }
  func.func @transform_2(%arg0: i32) -> (i32, i32) {
    %c0_i32 = arith.constant 0 : i32
    %c0_i32_0 = arith.constant 0 : i32
    %c0_i32_1 = arith.constant 0 : i32
    return %c0_i32, %c0_i32_0 : i32, i32
  }
  func.func @transform_3(%arg0: i32) -> (i32, i32) {
    %c0_i32 = arith.constant 0 : i32
    %c0_i32_0 = arith.constant 0 : i32
    %c0_i32_1 = arith.constant 0 : i32
    return %c0_i32, %c0_i32_0 : i32, i32
  }
  func.func @transform_4(%arg0: i32) -> (i32, i32) {
    %c0_i32 = arith.constant 0 : i32
    %c0_i32_0 = arith.constant 0 : i32
    %c0_i32_1 = arith.constant 0 : i32
    return %c0_i32, %c0_i32_0 : i32, i32
  }
  func.func @transform_5(%arg0: i32) -> (i32, i32) {
    %c0_i32 = arith.constant 0 : i32
    %c0_i32_0 = arith.constant 0 : i32
    %c0_i32_1 = arith.constant 0 : i32
    return %c0_i32, %c0_i32_0 : i32, i32
  }
  func.func @transform_6(%arg0: i32) -> (i32, i32) {
    %c0_i32 = arith.constant 0 : i32
    %c0_i32_0 = arith.constant 0 : i32
    %c0_i32_1 = arith.constant 0 : i32
    return %c0_i32, %c0_i32_0 : i32, i32
  }
  func.func @transform_7(%arg0: i32) -> (i32, i32) {
    %c0_i32 = arith.constant 0 : i32
    %c0_i32_0 = arith.constant 0 : i32
    return %c0_i32, %arg0 : i32, i32
  }
}

</mosaic_0001>

<llo_original>
// kernel: tpu_custom_call.1
$region0: #{tpu_custom_call.1}
  #allocation0 [shape = 'u32[]', space=smem, size = 0x4, offset = 0x4, fixed_abs, tag = 'smem constant byte address 0x4 - core index']
  #allocation1 [shape = 'u32[144,128]{1,0:T(1,128)}', space=vmem, size = 0x12000, scoped, tag = 'internal scratch']
  #allocation2 [shape = 'f32[1,1]{1,0:T(1,128)S(1)}', space=vmem, size = 0x200, scoped, tag = 'scoped memory for tpu_custom_call.1']
  %s0 = inlined_call_operand.vmem [shape: f32[128,16], index: 0, kind: input, shape index: {}]
  %s1 = inlined_call_operand.vmem [shape: f32[16,128], index: 1, kind: input, shape index: {}]
  %s2 = inlined_call_operand.vmem [shape: f32[1,128], index: 2, kind: input, shape index: {}]
  %s3 = inlined_call_operand.vmem [shape: f32[128,128], index: 3, kind: input, shape index: {}]
  %s4 = inlined_call_operand.vmem [shape: f32[1,128], index: 4, kind: input, shape index: {}]
  %s5 = inlined_call_operand.vmem [shape: f32[1,128], index: 5, kind: input, shape index: {}]
  %s6 = inlined_call_operand.<no memory space> [shape: f32[1,1], index: 6, kind: input, shape index: {}]
  %s7 = inlined_call_operand.hbm [shape: f32[1,128], index: 7, kind: output, shape index: {}]
  %s8 = sld [smem:[#allocation0]]
  $region38: #{tpu_custom_call.1} parent=0
    _
  %s10 = ssub.s32 1, %s8
  %s11 = scalar_select 0, %s10, %s8
  %v12 = vstv %s6
  %13 = vst [vmem:[#allocation2] sm:$0x1] %v12
  $region1: #{tpu_custom_call.1} parent=0
    #allocation3 [shape = 'u8[512]{0}', space=vmem, size = 0x400, scoped, tag = 'output window, operand 0, single buffered']
    #allocation4 [shape = 's32[1]{0}', space=sflag, size = 0x4, scoped, tag = 'scoped memory for tpu_custom_call.1']
    %14 = vsyncpa [#allocation4], 0
    // Predicated region
    $region2: #{tpu_custom_call.1} parent=1 // pred_check
      _
    $region3: #{tpu_custom_call.1} parent=1 // pred_check_branch
      %16 = sbr.rel (0) target = $region5
    $region4: #{tpu_custom_call.1} parent=1 // pred_region
      _
    $region5: #{tpu_custom_call.1} parent=1 // pred_fallthru
      _
    // Predicated region
    $region6: #{tpu_custom_call.1} parent=1 // pred_check
      _
    $region7: #{tpu_custom_call.1} parent=1 // pred_check_branch
      %18 = sbr.rel (0) target = $region9
    $region8: #{tpu_custom_call.1} parent=1 // pred_region
      _
    $region9: #{tpu_custom_call.1} parent=1 // pred_fallthru
      _
    // Predicated region
    $region10: #{tpu_custom_call.1} parent=1 // pred_check
      _
    $region11: #{tpu_custom_call.1} parent=1 // pred_check_branch
      %20 = sbr.rel (0) target = $region13
    $region12: #{tpu_custom_call.1} parent=1 // pred_region
      _
    $region13: #{tpu_custom_call.1} parent=1 // pred_fallthru
      _
    // Predicated region
    $region14: #{tpu_custom_call.1} parent=1 // pred_check
      _
    $region15: #{tpu_custom_call.1} parent=1 // pred_check_branch
      %22 = sbr.rel (0) target = $region17
    $region16: #{tpu_custom_call.1} parent=1 // pred_region
      _
    $region17: #{tpu_custom_call.1} parent=1 // pred_fallthru
      _
    // Predicated region
    $region18: #{tpu_custom_call.1} parent=1 // pred_check
      _
    $region19: #{tpu_custom_call.1} parent=1 // pred_check_branch
      %24 = sbr.rel (0) target = $region21
    $region20: #{tpu_custom_call.1} parent=1 // pred_region
      _
    $region21: #{tpu_custom_call.1} parent=1 // pred_fallthru
      _
    // Predicated region
    $region22: #{tpu_custom_call.1} parent=1 // pred_check
      _
    $region23: #{tpu_custom_call.1} parent=1 // pred_check_branch
      %26 = sbr.rel (0) target = $region25
    $region24: #{tpu_custom_call.1} parent=1 // pred_region
      _
    $region25: #{tpu_custom_call.1} parent=1 // pred_fallthru
      _
    // Predicated region
    $region26: #{tpu_custom_call.1} parent=1 // pred_check
      _
    $region27: #{tpu_custom_call.1} parent=1 // pred_check_branch
      %28 = sbr.rel (0) target = $region29
    $region28: #{tpu_custom_call.1} parent=1 // pred_region
      _
    $region29: #{tpu_custom_call.1} parent=1 // pred_fallthru
      _
    %v29 = vld [vmem:[%s0] sm:$0xff]
    %v30 = vld [vmem:[%s0 + $0x8] sm:$0xff]
    %v31 = vld [vmem:[%s0 + $0x10] sm:$0xff]
    %v32 = vld [vmem:[%s0 + $0x18] sm:$0xff]
    %v33 = vld [vmem:[%s0 + $0x20] sm:$0xff]
    %v34 = vld [vmem:[%s0 + $0x28] sm:$0xff]
    %v35 = vld [vmem:[%s0 + $0x30] sm:$0xff]
    %v36 = vld [vmem:[%s0 + $0x38] sm:$0xff]
    %v37 = vld [vmem:[%s0 + $0x40] sm:$0xff]
    %v38 = vld [vmem:[%s0 + $0x48] sm:$0xff]
    %v39 = vld [vmem:[%s0 + $0x50] sm:$0xff]
    %v40 = vld [vmem:[%s0 + $0x58] sm:$0xff]
    %v41 = vld [vmem:[%s0 + $0x60] sm:$0xff]
    %v42 = vld [vmem:[%s0 + $0x68] sm:$0xff]
    %v43 = vld [vmem:[%s0 + $0x70] sm:$0xff]
    %v44 = vld [vmem:[%s0 + $0x78] sm:$0xff]
    %v45 = vld [vmem:[%s1] sm:$0xff]
    %v46 = vld [vmem:[%s1 + $0x8] sm:$0xff]
    %v47 = vld [vmem:[%s2] sm:$0x1]
    %v49 = vlaneseq
    %v50 = vshrl.u32 %v49, 7
    %v51 = vsub.s32 0, %v50
    %v52 = vrot.slane %v47, %v51
    %vm54 = vcmask 130048
    %v56 = vsel %vm54, %v29, 0
    %v59 = vsel %vm54, %v30, 0
    %v62 = vsel %vm54, %v31, 0
    %v65 = vsel %vm54, %v32, 0
    %v68 = vsel %vm54, %v33, 0
    %v71 = vsel %vm54, %v34, 0
    %v74 = vsel %vm54, %v35, 0
    %v77 = vsel %vm54, %v36, 0
    %v80 = vsel %vm54, %v37, 0
    %v83 = vsel %vm54, %v38, 0
    %v86 = vsel %vm54, %v39, 0
    %v89 = vsel %vm54, %v40, 0
    %v92 = vsel %vm54, %v41, 0
    %v95 = vsel %vm54, %v42, 0
    %v98 = vsel %vm54, %v43, 0
    %v101 = vsel %vm54, %v44, 0
    %103 = vmatprep.subr.mxu0 0.0
    %104 = vmatpush1.msra.mxu0 %v45
    %105 = vmatprep.subr.mxu0 0.0
    %106 = vmatpush1.msra.mxu0 %v46
    %107 = vmatprep.subr.mxu0 0.0
    %108 = vmatpush1.msra.mxu0 0.0
    %109 = vmatprep.subr.mxu0 0.0
    %110 = vmatpush1.msra.mxu0 0.0
    %111 = vmatprep.subr.mxu0 0.0
    %112 = vmatpush1.msra.mxu0 0.0
    %113 = vmatprep.subr.mxu0 0.0
    %114 = vmatpush1.msra.mxu0 0.0
    %115 = vmatprep.subr.mxu0 0.0
    %116 = vmatpush1.msra.mxu0 0.0
    %117 = vmatprep.subr.mxu0 0.0
    %118 = vmatpush1.msra.mxu0 0.0
    %119 = vmatprep.subr.mxu0 0.0
    %120 = vmatpush1.msra.mxu0 0.0
    %121 = vmatprep.subr.mxu0 0.0
    %122 = vmatpush1.msra.mxu0 0.0
    %123 = vmatprep.subr.mxu0 0.0
    %124 = vmatpush1.msra.mxu0 0.0
    %125 = vmatprep.subr.mxu0 0.0
    %126 = vmatpush1.msra.mxu0 0.0
    %127 = vmatprep.subr.mxu0 0.0
    %128 = vmatpush1.msra.mxu0 0.0
    %129 = vmatprep.subr.mxu0 0.0
    %130 = vmatpush1.msra.mxu0 0.0
    %131 = vmatprep.subr.mxu0 0.0
    %132 = vmatpush1.msra.mxu0 0.0
    %133 = vmatprep.subr.mxu0 0.0
    %134 = vmatpush1.msra.mxu0 0.0
    %135 = vmatprep.subr.mxu0 0.0
    %136 = vmatpush1.msra.mxu0 0.0
    %137 = vmatprep.subr.mxu0 0.0
    %138 = vmatpush1.msra.mxu0 0.0
    %139 = vmatprep.subr.mxu0 0.0
    %140 = vmatpush1.msra.mxu0 0.0
    %141 = vmatprep.subr.mxu0 0.0
    %142 = vmatpush1.msra.mxu0 0.0
    %143 = vmatprep.subr.mxu0 0.0
    %144 = vmatpush1.msra.mxu0 0.0
    %145 = vmatprep.subr.mxu0 0.0
    %146 = vmatpush1.msra.mxu0 0.0
    %147 = vmatprep.subr.mxu0 0.0
    %148 = vmatpush1.msra.mxu0 0.0
    %149 = vmatprep.subr.mxu0 0.0
    %150 = vmatpush1.msra.mxu0 0.0
    %151 = vmatprep.subr.mxu0 0.0
    %152 = vmatpush1.msra.mxu0 0.0
    %153 = vmatprep.subr.mxu0 0.0
    %154 = vmatpush1.msra.mxu0 0.0
    %155 = vmatprep.subr.mxu0 0.0
    %156 = vmatpush1.msra.mxu0 0.0
    %157 = vmatprep.subr.mxu0 0.0
    %158 = vmatpush1.msra.mxu0 0.0
    %159 = vmatprep.subr.mxu0 0.0
    %160 = vmatpush1.msra.mxu0 0.0
    %161 = vmatprep.subr.mxu0 0.0
    %162 = vmatpush1.msra.mxu0 0.0
    %163 = vmatprep.subr.mxu0 0.0
    %164 = vmatpush1.msra.mxu0 0.0
    %165 = vmatprep.subr.mxu0 0.0
    %166 = vmatpush1.msra.mxu0 0.0
    %167 = vmatprep.mubr.f32.mxu0 0.0
    %168 = vmatmul.mubr.f32.gmra.mrb[0].mxu0 %v56
    %v169 = vpop.f32.mrb[0].mxu0
    %v170 = vadd.f32 %v52, %v169
    %v171 = vpop.f32.mrb[0].mxu0
    %172 = vmatprep.mubr.f32.mxu0 0.0
    %173 = vmatmul.mubr.f32.gmra.mrb[0].mxu0 %v59
    %v174 = vpop.f32.mrb[0].mxu0
    %v175 = vadd.f32 %v52, %v174
    %v176 = vpop.f32.mrb[0].mxu0
    %177 = vmatprep.mubr.f32.mxu0 0.0
    %178 = vmatmul.mubr.f32.gmra.mrb[0].mxu0 %v62
    %v179 = vpop.f32.mrb[0].mxu0
    %v180 = vadd.f32 %v52, %v179
    %v181 = vpop.f32.mrb[0].mxu0
    %182 = vmatprep.mubr.f32.mxu0 0.0
    %183 = vmatmul.mubr.f32.gmra.mrb[0].mxu0 %v65
    %v184 = vpop.f32.mrb[0].mxu0
    %v185 = vadd.f32 %v52, %v184
    %v186 = vpop.f32.mrb[0].mxu0
    %187 = vmatprep.mubr.f32.mxu0 0.0
    %188 = vmatmul.mubr.f32.gmra.mrb[0].mxu0 %v68
    %v189 = vpop.f32.mrb[0].mxu0
    %v190 = vadd.f32 %v52, %v189
    %v191 = vpop.f32.mrb[0].mxu0
    %192 = vmatprep.mubr.f32.mxu0 0.0
    %193 = vmatmul.mubr.f32.gmra.mrb[0].mxu0 %v71
    %v194 = vpop.f32.mrb[0].mxu0
    %v195 = vadd.f32 %v52, %v194
    %v196 = vpop.f32.mrb[0].mxu0
    %197 = vmatprep.mubr.f32.mxu0 0.0
    %198 = vmatmul.mubr.f32.gmra.mrb[0].mxu0 %v74
    %v199 = vpop.f32.mrb[0].mxu0
    %v200 = vadd.f32 %v52, %v199
    %v201 = vpop.f32.mrb[0].mxu0
    %202 = vmatprep.mubr.f32.mxu0 0.0
    %203 = vmatmul.mubr.f32.gmra.mrb[0].mxu0 %v77
    %v204 = vpop.f32.mrb[0].mxu0
    %v205 = vadd.f32 %v52, %v204
    %v206 = vpop.f32.mrb[0].mxu0
    %207 = vmatprep.mubr.f32.mxu0 0.0
    %208 = vmatmul.mubr.f32.gmra.mrb[0].mxu0 %v80
    %v209 = vpop.f32.mrb[0].mxu0
    %v210 = vadd.f32 %v52, %v209
    %v211 = vpop.f32.mrb[0].mxu0
    %212 = vmatprep.mubr.f32.mxu0 0.0
    %213 = vmatmul.mubr.f32.gmra.mrb[0].mxu0 %v83
    %v214 = vpop.f32.mrb[0].mxu0
    %v215 = vadd.f32 %v52, %v214
    %v216 = vpop.f32.mrb[0].mxu0
    %217 = vmatprep.mubr.f32.mxu0 0.0
    %218 = vmatmul.mubr.f32.gmra.mrb[0].mxu0 %v86
    %v219 = vpop.f32.mrb[0].mxu0
    %v220 = vadd.f32 %v52, %v219
    %v221 = vpop.f32.mrb[0].mxu0
    %222 = vmatprep.mubr.f32.mxu0 0.0
    %223 = vmatmul.mubr.f32.gmra.mrb[0].mxu0 %v89
    %v224 = vpop.f32.mrb[0].mxu0
    %v225 = vadd.f32 %v52, %v224
    %v226 = vpop.f32.mrb[0].mxu0
    %227 = vmatprep.mubr.f32.mxu0 0.0
    %228 = vmatmul.mubr.f32.gmra.mrb[0].mxu0 %v92
    %v229 = vpop.f32.mrb[0].mxu0
    %v230 = vadd.f32 %v52, %v229
    %v231 = vpop.f32.mrb[0].mxu0
    %232 = vmatprep.mubr.f32.mxu0 0.0
    %233 = vmatmul.mubr.f32.gmra.mrb[0].mxu0 %v95
    %v234 = vpop.f32.mrb[0].mxu0
    %v235 = vadd.f32 %v52, %v234
    %v236 = vpop.f32.mrb[0].mxu0
    %237 = vmatprep.mubr.f32.mxu0 0.0
    %238 = vmatmul.mubr.f32.gmra.mrb[0].mxu0 %v98
    %v239 = vpop.f32.mrb[0].mxu0
    %v240 = vadd.f32 %v52, %v239
    %v241 = vpop.f32.mrb[0].mxu0
    %242 = vmatprep.mubr.f32.mxu0 0.0
    %243 = vmatmul.mubr.f32.gmra.mrb[0].mxu0 %v101
    %v244 = vpop.f32.mrb[0].mxu0
    %v245 = vadd.f32 %v52, %v244
    %v246 = vpop.f32.mrb[0].mxu0
    %247 = vdwg.mxu0
    %v248 = vmax.f32 %v170, 0.0
    %v249 = vmax.f32 %v175, 0.0
    %v250 = vmax.f32 %v180, 0.0
    %v251 = vmax.f32 %v185, 0.0
    %v252 = vmax.f32 %v190, 0.0
    %v253 = vmax.f32 %v195, 0.0
    %v254 = vmax.f32 %v200, 0.0
    %v255 = vmax.f32 %v205, 0.0
    %v256 = vmax.f32 %v210, 0.0
    %v257 = vmax.f32 %v215, 0.0
    %v258 = vmax.f32 %v220, 0.0
    %v259 = vmax.f32 %v225, 0.0
    %v260 = vmax.f32 %v230, 0.0
    %v261 = vmax.f32 %v235, 0.0
    %v262 = vmax.f32 %v240, 0.0
    %v263 = vmax.f32 %v245, 0.0
    %v264 = vld [vmem:[%s3] sm:$0xff]
    %v265 = vld [vmem:[%s3 + $0x8] sm:$0xff]
    %v266 = vld [vmem:[%s3 + $0x10] sm:$0xff]
    %v267 = vld [vmem:[%s3 + $0x18] sm:$0xff]
    %v268 = vld [vmem:[%s3 + $0x20] sm:$0xff]
    %v269 = vld [vmem:[%s3 + $0x28] sm:$0xff]
    %v270 = vld [vmem:[%s3 + $0x30] sm:$0xff]
    %v271 = vld [vmem:[%s3 + $0x38] sm:$0xff]
    %v272 = vld [vmem:[%s3 + $0x40] sm:$0xff]
    %v273 = vld [vmem:[%s3 + $0x48] sm:$0xff]
    %v274 = vld [vmem:[%s3 + $0x50] sm:$0xff]
    %v275 = vld [vmem:[%s3 + $0x58] sm:$0xff]
    %v276 = vld [vmem:[%s3 + $0x60] sm:$0xff]
    %v277 = vld [vmem:[%s3 + $0x68] sm:$0xff]
    %v278 = vld [vmem:[%s3 + $0x70] sm:$0xff]
    %v279 = vld [vmem:[%s3 + $0x78] sm:$0xff]
    %v280 = vld [vmem:[%s4] sm:$0x1]
    %v282 = vlaneseq
    %v283 = vshrl.u32 %v282, 7
    %v284 = vsub.s32 0, %v283
    %v285 = vrot.slane %v280, %v284
    %287 = vmatprep.subr.mxu0 0.0
    %288 = vmatpush1.msra.mxu0 %v264
    %289 = vmatprep.subr.mxu0 0.0
    %290 = vmatpush1.msra.mxu0 %v265
    %291 = vmatprep.subr.mxu0 0.0
    %292 = vmatpush1.msra.mxu0 %v266
    %293 = vmatprep.subr.mxu0 0.0
    %294 = vmatpush1.msra.mxu0 %v267
    %295 = vmatprep.subr.mxu0 0.0
    %296 = vmatpush1.msra.mxu0 %v268
    %297 = vmatprep.subr.mxu0 0.0
    %298 = vmatpush1.msra.mxu0 %v269
    %299 = vmatprep.subr.mxu0 0.0
    %300 = vmatpush1.msra.mxu0 %v270
    %301 = vmatprep.subr.mxu0 0.0
    %302 = vmatpush1.msra.mxu0 %v271
    %303 = vmatprep.subr.mxu0 0.0
    %304 = vmatpush1.msra.mxu0 %v272
    %305 = vmatprep.subr.mxu0 0.0
    %306 = vmatpush1.msra.mxu0 %v273
    %307 = vmatprep.subr.mxu0 0.0
    %308 = vmatpush1.msra.mxu0 %v274
    %309 = vmatprep.subr.mxu0 0.0
    %310 = vmatpush1.msra.mxu0 %v275
    %311 = vmatprep.subr.mxu0 0.0
    %312 = vmatpush1.msra.mxu0 %v276
    %313 = vmatprep.subr.mxu0 0.0
    %314 = vmatpush1.msra.mxu0 %v277
    %315 = vmatprep.subr.mxu0 0.0
    %316 = vmatpush1.msra.mxu0 %v278
    %317 = vmatprep.subr.mxu0 0.0
    %318 = vmatpush1.msra.mxu0 %v279
    %319 = vmatprep.subr.mxu0 0.0
    %320 = vmatpush1.msra.mxu0 0.0
    %321 = vmatprep.subr.mxu0 0.0
    %322 = vmatpush1.msra.mxu0 0.0
    %323 = vmatprep.subr.mxu0 0.0
    %324 = vmatpush1.msra.mxu0 0.0
    %325 = vmatprep.subr.mxu0 0.0
    %326 = vmatpush1.msra.mxu0 0.0
    %327 = vmatprep.subr.mxu0 0.0
    %328 = vmatpush1.msra.mxu0 0.0
    %329 = vmatprep.subr.mxu0 0.0
    %330 = vmatpush1.msra.mxu0 0.0
    %331 = vmatprep.subr.mxu0 0.0
    %332 = vmatpush1.msra.mxu0 0.0
    %333 = vmatprep.subr.mxu0 0.0
    %334 = vmatpush1.msra.mxu0 0.0
    %335 = vmatprep.subr.mxu0 0.0
    %336 = vmatpush1.msra.mxu0 0.0
    %337 = vmatprep.subr.mxu0 0.0
    %338 = vmatpush1.msra.mxu0 0.0
    %339 = vmatprep.subr.mxu0 0.0
    %340 = vmatpush1.msra.mxu0 0.0
    %341 = vmatprep.subr.mxu0 0.0
    %342 = vmatpush1.msra.mxu0 0.0
    %343 = vmatprep.subr.mxu0 0.0
    %344 = vmatpush1.msra.mxu0 0.0
    %345 = vmatprep.subr.mxu0 0.0
    %346 = vmatpush1.msra.mxu0 0.0
    %347 = vmatprep.subr.mxu0 0.0
    %348 = vmatpush1.msra.mxu0 0.0
    %349 = vmatprep.subr.mxu0 0.0
    %350 = vmatpush1.msra.mxu0 0.0
    %351 = vmatprep.mubr.f32.mxu0 0.0
    %352 = vmatmul.mubr.f32.gmra.mrb[0].mxu0 %v248
    %v353 = vpop.f32.mrb[0].mxu0
    %v354 = vadd.f32 %v285, %v353
    %v355 = vpop.f32.mrb[0].mxu0
    %356 = vmatprep.mubr.f32.mxu0 0.0
    %357 = vmatmul.mubr.f32.gmra.mrb[0].mxu0 %v249
    %v358 = vpop.f32.mrb[0].mxu0
    %v359 = vadd.f32 %v285, %v358
    %v360 = vpop.f32.mrb[0].mxu0
    %361 = vmatprep.mubr.f32.mxu0 0.0
    %362 = vmatmul.mubr.f32.gmra.mrb[0].mxu0 %v250
    %v363 = vpop.f32.mrb[0].mxu0
    %v364 = vadd.f32 %v285, %v363
    %v365 = vpop.f32.mrb[0].mxu0
    %366 = vmatprep.mubr.f32.mxu0 0.0
    %367 = vmatmul.mubr.f32.gmra.mrb[0].mxu0 %v251
    %v368 = vpop.f32.mrb[0].mxu0
    %v369 = vadd.f32 %v285, %v368
    %v370 = vpop.f32.mrb[0].mxu0
    %371 = vmatprep.mubr.f32.mxu0 0.0
    %372 = vmatmul.mubr.f32.gmra.mrb[0].mxu0 %v252
    %v373 = vpop.f32.mrb[0].mxu0
    %v374 = vadd.f32 %v285, %v373
    %v375 = vpop.f32.mrb[0].mxu0
    %376 = vmatprep.mubr.f32.mxu0 0.0
    %377 = vmatmul.mubr.f32.gmra.mrb[0].mxu0 %v253
    %v378 = vpop.f32.mrb[0].mxu0
    %v379 = vadd.f32 %v285, %v378
    %v380 = vpop.f32.mrb[0].mxu0
    %381 = vmatprep.mubr.f32.mxu0 0.0
    %382 = vmatmul.mubr.f32.gmra.mrb[0].mxu0 %v254
    %v383 = vpop.f32.mrb[0].mxu0
    %v384 = vadd.f32 %v285, %v383
    %v385 = vpop.f32.mrb[0].mxu0
    %386 = vmatprep.mubr.f32.mxu0 0.0
    %387 = vmatmul.mubr.f32.gmra.mrb[0].mxu0 %v255
    %v388 = vpop.f32.mrb[0].mxu0
    %v389 = vadd.f32 %v285, %v388
    %v390 = vpop.f32.mrb[0].mxu0
    %391 = vmatprep.mubr.f32.mxu0 0.0
    %392 = vmatmul.mubr.f32.gmra.mrb[0].mxu0 %v256
    %v393 = vpop.f32.mrb[0].mxu0
    %v394 = vadd.f32 %v285, %v393
    %v395 = vpop.f32.mrb[0].mxu0
    %396 = vmatprep.mubr.f32.mxu0 0.0
    %397 = vmatmul.mubr.f32.gmra.mrb[0].mxu0 %v257
    %v398 = vpop.f32.mrb[0].mxu0
    %v399 = vadd.f32 %v285, %v398
    %v400 = vpop.f32.mrb[0].mxu0
    %401 = vmatprep.mubr.f32.mxu0 0.0
    %402 = vmatmul.mubr.f32.gmra.mrb[0].mxu0 %v258
    %v403 = vpop.f32.mrb[0].mxu0
    %v404 = vadd.f32 %v285, %v403
    %v405 = vpop.f32.mrb[0].mxu0
    %406 = vmatprep.mubr.f32.mxu0 0.0
    %407 = vmatmul.mubr.f32.gmra.mrb[0].mxu0 %v259
    %v408 = vpop.f32.mrb[0].mxu0
    %v409 = vadd.f32 %v285, %v408
    %v410 = vpop.f32.mrb[0].mxu0
    %411 = vmatprep.mubr.f32.mxu0 0.0
    %412 = vmatmul.mubr.f32.gmra.mrb[0].mxu0 %v260
    %v413 = vpop.f32.mrb[0].mxu0
    %v414 = vadd.f32 %v285, %v413
    %v415 = vpop.f32.mrb[0].mxu0
    %416 = vmatprep.mubr.f32.mxu0 0.0
    %417 = vmatmul.mubr.f32.gmra.mrb[0].mxu0 %v261
    %v418 = vpop.f32.mrb[0].mxu0
    %v419 = vadd.f32 %v285, %v418
    %v420 = vpop.f32.mrb[0].mxu0
    %421 = vmatprep.mubr.f32.mxu0 0.0
    %422 = vmatmul.mubr.f32.gmra.mrb[0].mxu0 %v262
    %v423 = vpop.f32.mrb[0].mxu0
    %v424 = vadd.f32 %v285, %v423
    %v425 = vpop.f32.mrb[0].mxu0
    %426 = vmatprep.mubr.f32.mxu0 0.0
    %427 = vmatmul.mubr.f32.gmra.mrb[0].mxu0 %v263
    %v428 = vpop.f32.mrb[0].mxu0
    %v429 = vadd.f32 %v285, %v428
    %v430 = vpop.f32.mrb[0].mxu0
    %431 = vdwg.mxu0
    %v432 = vmax.f32 %v354, 0.0
    %v433 = vmax.f32 %v359, 0.0
    %v434 = vmax.f32 %v364, 0.0
    %v435 = vmax.f32 %v369, 0.0
    %v436 = vmax.f32 %v374, 0.0
    %v437 = vmax.f32 %v379, 0.0
    %v438 = vmax.f32 %v384, 0.0
    %v439 = vmax.f32 %v389, 0.0
    %v440 = vmax.f32 %v394, 0.0
    %v441 = vmax.f32 %v399, 0.0
    %v442 = vmax.f32 %v404, 0.0
    %v443 = vmax.f32 %v409, 0.0
    %v444 = vmax.f32 %v414, 0.0
    %v445 = vmax.f32 %v419, 0.0
    %v446 = vmax.f32 %v424, 0.0
    %v447 = vmax.f32 %v429, 0.0
    %v448 = vld [vmem:[%s5] sm:$0x1]
    %v449 = vld [vmem:[#allocation2] sm:$0x1]
    %451 = vset.pattern.permute.xlu0 0
    %452 = vperm.xlu0 %451, %v449
    %v453 = vpop.permute.xlu0 %452
    %v455 = vlaneseq
    %v456 = vshrl.u32 %v455, 7
    %v457 = vsub.s32 0, %v456
    %v458 = vrot.slane %v453, %v457
    %459 = vmatprep.subr.mxu0 0.0
    %460 = vmatpush1.xpose.msra.mxu0 %v432
    %461 = vmatprep.subr.mxu0 0.0
    %462 = vmatpush1.xpose.msra.mxu0 %v433
    %463 = vmatprep.subr.mxu0 0.0
    %464 = vmatpush1.xpose.msra.mxu0 %v434
    %465 = vmatprep.subr.mxu0 0.0
    %466 = vmatpush1.xpose.msra.mxu0 %v435
    %467 = vmatprep.subr.mxu0 0.0
    %468 = vmatpush1.xpose.msra.mxu0 %v436
    %469 = vmatprep.subr.mxu0 0.0
    %470 = vmatpush1.xpose.msra.mxu0 %v437
    %471 = vmatprep.subr.mxu0 0.0
    %472 = vmatpush1.xpose.msra.mxu0 %v438
    %473 = vmatprep.subr.mxu0 0.0
    %474 = vmatpush1.xpose.msra.mxu0 %v439
    %475 = vmatprep.subr.mxu0 0.0
    %476 = vmatpush1.xpose.msra.mxu0 %v440
    %477 = vmatprep.subr.mxu0 0.0
    %478 = vmatpush1.xpose.msra.mxu0 %v441
    %479 = vmatprep.subr.mxu0 0.0
    %480 = vmatpush1.xpose.msra.mxu0 %v442
    %481 = vmatprep.subr.mxu0 0.0
    %482 = vmatpush1.xpose.msra.mxu0 %v443
    %483 = vmatprep.subr.mxu0 0.0
    %484 = vmatpush1.xpose.msra.mxu0 %v444
    %485 = vmatprep.subr.mxu0 0.0
    %486 = vmatpush1.xpose.msra.mxu0 %v445
    %487 = vmatprep.subr.mxu0 0.0
    %488 = vmatpush1.xpose.msra.mxu0 %v446
    %489 = vmatprep.subr.mxu0 0.0
    %490 = vmatpush1.xpose.msra.mxu0 %v447
    %491 = vmatprep.subr.mxu0 0.0
    %492 = vmatpush1.xpose.msra.mxu0 0.0
    %493 = vmatprep.subr.mxu0 0.0
    %494 = vmatpush1.xpose.msra.mxu0 0.0
    %495 = vmatprep.subr.mxu0 0.0
    %496 = vmatpush1.xpose.msra.mxu0 0.0
    %497 = vmatprep.subr.mxu0 0.0
    %498 = vmatpush1.xpose.msra.mxu0 0.0
    %499 = vmatprep.subr.mxu0 0.0
    %500 = vmatpush1.xpose.msra.mxu0 0.0
    %501 = vmatprep.subr.mxu0 0.0
    %502 = vmatpush1.xpose.msra.mxu0 0.0
    %503 = vmatprep.subr.mxu0 0.0
    %504 = vmatpush1.xpose.msra.mxu0 0.0
    %505 = vmatprep.subr.mxu0 0.0
    %506 = vmatpush1.xpose.msra.mxu0 0.0
    %507 = vmatprep.subr.mxu0 0.0
    %508 = vmatpush1.xpose.msra.mxu0 0.0
    %509 = vmatprep.subr.mxu0 0.0
    %510 = vmatpush1.xpose.msra.mxu0 0.0
    %511 = vmatprep.subr.mxu0 0.0
    %512 = vmatpush1.xpose.msra.mxu0 0.0
    %513 = vmatprep.subr.mxu0 0.0
    %514 = vmatpush1.xpose.msra.mxu0 0.0
    %515 = vmatprep.subr.mxu0 0.0
    %516 = vmatpush1.xpose.msra.mxu0 0.0
    %517 = vmatprep.subr.mxu0 0.0
    %518 = vmatpush1.xpose.msra.mxu0 0.0
    %519 = vmatprep.subr.mxu0 0.0
    %520 = vmatpush1.xpose.msra.mxu0 0.0
    %521 = vmatprep.subr.mxu0 0.0
    %522 = vmatpush1.xpose.msra.mxu0 0.0
    %523 = vmatprep.mubr.f32.mxu0 0.0
    %524 = vmatmul.mubr.f32.gmra.mrb[0].mxu0 %v448
    %v525 = vpop.f32.mrb[0].mxu0
    %v526 = vadd.f32 %v458, %v525
    %v527 = vpop.f32.mrb[0].mxu0
    %528 = vdwg.mxu0
    %529 = vst [vmem:[#allocation3] sm:$0x1] %v526
    // Predicated region
    $region30: #{tpu_custom_call.1} parent=1 // pred_check
      _
    $region31: #{tpu_custom_call.1} parent=1 // pred_check_branch
      %531 = sbr.rel (0) target = $region33
    $region32: #{tpu_custom_call.1} parent=1 // pred_region
      %s533 = ssub.s32 16, 16
      %534 = vsyncadd [#allocation4], %s533
      %s536 = sshll.u32 [#allocation3], 4
      %s537 = int_to_ptr.vmem [resolvable:$true] %s536
      %539 = dma.vmem_to_hbm [thread:$0]  %s537, 16, %s7, [#allocation4]
    $region33: #{tpu_custom_call.1} parent=1 // pred_fallthru
      _
    // Predicated region
    $region34: #{tpu_custom_call.1} parent=1 // pred_check
      _
    $region35: #{tpu_custom_call.1} parent=1 // pred_check_branch
      %541 = sbr.rel (0) target = $region37
    $region36: #{tpu_custom_call.1} parent=1 // pred_region
      %542 = dma.done [#allocation4], 16
    $region37: #{tpu_custom_call.1} parent=1 // pred_fallthru
      _
    %543 = vsyncpa [#allocation4], 1

</llo_original>
